<compile_context>
chip_gen: v7x
topology: tpu7x:2x2x1
jax: 0.10.0
libtpu: 0.0.40
codegen_flags: <defaults>
</compile_context>

<pallas_src>
import jax
import jax.numpy as jnp
from jax import lax
from jax.experimental import pallas as pl
from jax.experimental.pallas import tpu as pltpu

T_TEMPERATURE = 1.0   # self.t in the PyTorch module
EPS = 1e-8            # F.cosine_similarity default eps
VMEM_BUDGET = 28 * 1024 * 1024   # conservative tile budget (fits v7x 64 MiB VMEM)


def _round_up(x, m):
    return (x + m - 1) // m * m


def cencon_loss(hashcode, center, label, *, tile_n=512):
    """hashcode: [N, D], center: [C, D], label: [N, C] (any float/int dtype) -> f32 loss."""
    n, d = hashcode.shape
    c, d2 = center.shape
    assert d == d2 and label.shape == (n, c)

    # --- grid-invariant center work, hoisted out of the kernel (runs once per call) ---
    c32 = center.astype(jnp.float32)
    c_inv = lax.rsqrt(jnp.maximum(jnp.sum(c32 * c32, axis=-1, keepdims=True), EPS * EPS))
    centers_nt = (c32 * c_inv).T                      # [D, C], normalized + pre-transposed

    in_bytes = jnp.dtype(hashcode.dtype).itemsize
    lbl_bytes = jnp.dtype(label.dtype).itemsize

    # --- tile selection -----------------------------------------------------------
    tn = min(tile_n, _round_up(n, 8))
    # Prefer >= 2 row tiles so the "parallel" axis can split across v7x's 2 TCs.
    if n >= 16 and _round_up(n, tn) // tn < 2:
        tn = _round_up((n + 1) // 2, 8)

    def _vmem_bytes(t):
        stream = 2 * t * (d * in_bytes + c * lbl_bytes)   # double-buffered streamed inputs
        resident = 2 * c * d * 4                          # normalized centers (f32)
        temps = 4 * t * c * 4 + 2 * t * d * 4             # lab/scaled/e/e*lab + hn
        out = 2 * 8 * 128 * 4
        return stream + resident + temps + out

    while tn > 8 and _vmem_bytes(tn) > VMEM_BUDGET:
        tn = _round_up(tn // 2, 8)

    n_pad = _round_up(n, tn)
    if n_pad != n:
        hashcode = jnp.pad(hashcode, ((0, n_pad - n), (0, 0)))
        label = jnp.pad(label, ((0, n_pad - n), (0, 0)))
    grid_n = n_pad // tn

    vmem_limit = int(min(max(2 * _vmem_bytes(tn), 32 * 1024 * 1024), 60 * 1024 * 1024))

    # --- kernel (closes over static n / n_pad / tn) ------------------------------
    def kernel(h_ref, cnt_ref, lbl_ref, out_ref):
        h32 = h_ref[...].astype(jnp.float32)                       # [tn, d]
        # per-row inverse norm; temperature folded in; rsqrt -> EUP slot
        h_inv = T_TEMPERATURE * lax.rsqrt(
            jnp.maximum(jnp.sum(h32 * h32, axis=-1, keepdims=True), EPS * EPS))
        hn = h32 * h_inv                                           # [tn, d]

        # centers arrive pre-normalized & pre-transposed -> plain MXU matmul,
        # result is already cos_sim * t
        scaled = jnp.dot(hn, cnt_ref[...], preferred_element_type=jnp.float32)  # [tn, c]

        e = jnp.exp(scaled)                                        # [tn, c] (EUP)
        lab = lbl_ref[...].astype(jnp.float32)                     # narrow dtype -> f32
        pos = jnp.sum(e * lab, axis=1, keepdims=True)              # [tn, 1]
        tot = jnp.sum(e, axis=1, keepdims=True)                    # [tn, 1]
        den = tot - pos                                            # == sum(e * (1 - label))

        # -log(pos / den) == log(den) - log(pos)
        loss_rows = jnp.log(den) - jnp.log(pos)                    # [tn, 1]

        if n_pad != n:                                             # static branch
            row = pl.program_id(0) * tn + lax.broadcasted_iota(jnp.int32, (tn, 1), 0)
            loss_rows = jnp.where(row < n, loss_rows, 0.0)

        tile_sum = jnp.sum(loss_rows, axis=0, keepdims=True)       # (1, 1)
        # lane-dense, unmasked (8,128) store of the per-tile partial sum
        out_ref[...] = jnp.broadcast_to(tile_sum, (8, 128))

    out = pl.pallas_call(
        kernel,
        out_shape=jax.ShapeDtypeStruct((grid_n * 8, 128), jnp.float32),
        grid_spec=pltpu.PrefetchScalarGridSpec(
            num_scalar_prefetch=0,
            grid=(grid_n,),
            in_specs=[
                pl.BlockSpec((tn, d), lambda i: (i, 0)),   # hashcode tile
                pl.BlockSpec((d, c), lambda i: (0, 0)),    # normalized centers: resident
                pl.BlockSpec((tn, c), lambda i: (i, 0)),   # label tile (narrow dtype ok)
            ],
            out_specs=pl.BlockSpec((8, 128), lambda i: (i, 0)),
        ),
        compiler_params=pltpu.CompilerParams(
            dimension_semantics=("parallel",),
            vmem_limit_bytes=vmem_limit,
        ),
    )(hashcode, centers_nt, label)

    per_tile = out[::8, 0]                 # tile sums (value replicated across each block)
    return jnp.sum(per_tile) / n           # mean over the true batch


def cencon_loss_ref(hashcode, center, label):
    # Pure-JAX reference matching torch semantics.
    h = hashcode.astype(jnp.float32)
    c = center.astype(jnp.float32)
    lab = label.astype(jnp.float32)
    hn = jnp.maximum(jnp.linalg.norm(h, axis=-1, keepdims=True), EPS)
    cn = jnp.maximum(jnp.linalg.norm(c, axis=-1, keepdims=True), EPS)
    cos = (h / hn) @ (c / cn).T
    e = jnp.exp(cos * T_TEMPERATURE)
    pos = jnp.sum(e * lab, axis=1)
    den = jnp.sum(e * (1.0 - lab), axis=1)
    return jnp.mean(-jnp.log(pos / den))


if __name__ == "__main__":
    key = jax.random.PRNGKey(0)
    k1, k2, k3 = jax.random.split(key, 3)

    # Small shapes consistent with the module: N hashcodes of dimension D, C centers.
    N, C, D = 8, 4, 32
    hashcode = jax.random.normal(k1, (N, D), dtype=jnp.float32)
    center = jax.random.normal(k2, (C, D), dtype=jnp.float32)
    cls = jax.random.randint(k3, (N,), 0, C)
    label = jax.nn.one_hot(cls, C, dtype=jnp.bfloat16)   # narrow label stream (exact 0/1)

    loss = jax.block_until_ready(cencon_loss(hashcode, center, label))
    ref = jax.block_until_ready(cencon_loss_ref(hashcode, center, label))
    assert jnp.allclose(loss, ref, rtol=1e-4, atol=1e-4), (loss, ref)

    # Second shape: exercises a multi-tile grid and padded-row masking.
    k4, k5, k6 = jax.random.split(jax.random.PRNGKey(1), 3)
    N2, C2, D2 = 20, 6, 32
    h2 = jax.random.normal(k4, (N2, D2), dtype=jnp.float32)
    c2 = jax.random.normal(k5, (C2, D2), dtype=jnp.float32)
    lbl2 = jax.nn.one_hot(jax.random.randint(k6, (N2,), 0, C2), C2, dtype=jnp.bfloat16)
    loss2 = jax.block_until_ready(cencon_loss(h2, c2, lbl2))
    ref2 = jax.block_until_ready(cencon_loss_ref(h2, c2, lbl2))
    assert jnp.allclose(loss2, ref2, rtol=1e-4, atol=1e-4), (loss2, ref2)

    print("KERNEL_OK")
</pallas_src>

<mosaic_0001>
module attributes {stable_mosaic.version = 11 : i64} {
  func.func @kernel(%arg0: i32, %arg1: memref<8x32xf32, #tpu.memory_space<vmem>>, %arg2: memref<32x4xf32, #tpu.memory_space<vmem>>, %arg3: memref<8x4xbf16, #tpu.memory_space<vmem>>, %arg4: memref<8x128xf32, #tpu.memory_space<vmem>>) attributes {dimension_semantics = [#tpu.dimension_semantics<parallel>], iteration_bounds = array<i64: 1>, scalar_prefetch = 0 : i64, scratch_operands = 0 : i64, tpu.core_type = #tpu.core_type<tc>, window_params = [{transform_indices = @transform_0, window_bounds = array<i64: 8, 32>}, {pipeline_mode = #tpu.pipeline_mode<synchronous>, transform_indices = @transform_1, window_bounds = array<i64: 32, 4>}, {transform_indices = @transform_2, window_bounds = array<i64: 8, 4>}, {transform_indices = @transform_3, window_bounds = array<i64: 8, 128>}]} {
    %c0 = arith.constant 0 : index
    %c0_0 = arith.constant 0 : index
    %0 = vector.load %arg1[%c0, %c0_0] : memref<8x32xf32, #tpu.memory_space<vmem>>, vector<8x32xf32>
    %1 = arith.mulf %0, %0 : vector<8x32xf32>
    %cst = arith.constant dense<0.000000e+00> : vector<8xf32>
    %2 = vector.multi_reduction <add>, %1, %cst [1] : vector<8x32xf32> to vector<8xf32>
    %3 = vector.shape_cast %2 : vector<8xf32> to vector<8x1xf32>
    %cst_1 = arith.constant 1.000000e-16 : f32
    %4 = vector.broadcast %cst_1 : f32 to vector<8x1xf32>
    %5 = arith.maximumf %3, %4 : vector<8x1xf32>
    %6 = math.rsqrt %5 : vector<8x1xf32>
    %cst_2 = arith.constant 1.000000e+00 : f32
    %7 = vector.broadcast %cst_2 : f32 to vector<8x1xf32>
    %8 = arith.mulf %7, %6 : vector<8x1xf32>
    %9 = vector.broadcast %8 : vector<8x1xf32> to vector<8x32xf32>
    %10 = arith.mulf %0, %9 : vector<8x32xf32>
    %c0_3 = arith.constant 0 : index
    %c0_4 = arith.constant 0 : index
    %11 = vector.load %arg2[%c0_3, %c0_4] : memref<32x4xf32, #tpu.memory_space<vmem>>, vector<32x4xf32>
    %cst_5 = arith.constant dense<0.000000e+00> : vector<8x4xf32>
    %12 = tpu.matmul %10, %11, %cst_5 {dimension_numbers = #tpu.dot_dimension_numbers<[1], [0], [0], [1], [0, 0, 1, 1], [], []>} : vector<8x32xf32>, vector<32x4xf32>, vector<8x4xf32> -> vector<8x4xf32>
    %13 = math.exp %12 : vector<8x4xf32>
    %c0_6 = arith.constant 0 : index
    %c0_7 = arith.constant 0 : index
    %14 = vector.load %arg3[%c0_6, %c0_7] : memref<8x4xbf16, #tpu.memory_space<vmem>>, vector<8x4xbf16>
    %15 = arith.extf %14 : vector<8x4xbf16> to vector<8x4xf32>
    %16 = arith.mulf %13, %15 : vector<8x4xf32>
    %cst_8 = arith.constant dense<0.000000e+00> : vector<8xf32>
    %17 = vector.multi_reduction <add>, %16, %cst_8 [1] : vector<8x4xf32> to vector<8xf32>
    %18 = vector.shape_cast %17 : vector<8xf32> to vector<8x1xf32>
    %cst_9 = arith.constant dense<0.000000e+00> : vector<8xf32>
    %19 = vector.multi_reduction <add>, %13, %cst_9 [1] : vector<8x4xf32> to vector<8xf32>
    %20 = vector.shape_cast %19 : vector<8xf32> to vector<8x1xf32>
    %21 = arith.subf %20, %18 : vector<8x1xf32>
    %22 = math.log %21 : vector<8x1xf32>
    %23 = math.log %18 : vector<8x1xf32>
    %24 = arith.subf %22, %23 : vector<8x1xf32>
    %cst_10 = arith.constant dense<0.000000e+00> : vector<1xf32>
    %25 = vector.multi_reduction <add>, %24, %cst_10 [0] : vector<8x1xf32> to vector<1xf32>
    %26 = vector.shape_cast %25 : vector<1xf32> to vector<1x1xf32>
    %27 = vector.shape_cast %26 : vector<1x1xf32> to vector<1x1xf32>
    %28 = vector.broadcast %27 : vector<1x1xf32> to vector<8x128xf32>
    %c0_11 = arith.constant 0 : index
    %c0_12 = arith.constant 0 : index
    %29 = vector.load %arg4[%c0_11, %c0_12] : memref<8x128xf32, #tpu.memory_space<vmem>>, vector<8x128xf32>
    tpu.vector_store %arg4[%c0_11, %c0_12], %28 {strides = array<i32>} : memref<8x128xf32, #tpu.memory_space<vmem>>, vector<8x128xf32>,
    return
  }
  func.func @transform_0(%arg0: i32) -> (i32, i32) {
    %c0_i32 = arith.constant 0 : i32
    %c0_i32_0 = arith.constant 0 : i32
    return %arg0, %c0_i32 : i32, i32
  }
  func.func @transform_1(%arg0: i32) -> (i32, i32) {
    %c0_i32 = arith.constant 0 : i32
    %c0_i32_0 = arith.constant 0 : i32
    %c0_i32_1 = arith.constant 0 : i32
    return %c0_i32, %c0_i32_0 : i32, i32
  }
  func.func @transform_2(%arg0: i32) -> (i32, i32) {
    %c0_i32 = arith.constant 0 : i32
    %c0_i32_0 = arith.constant 0 : i32
    return %arg0, %c0_i32 : i32, i32
  }
  func.func @transform_3(%arg0: i32) -> (i32, i32) {
    %c0_i32 = arith.constant 0 : i32
    %c0_i32_0 = arith.constant 0 : i32
    return %arg0, %c0_i32 : i32, i32
  }
}

</mosaic_0001>

<llo_original>
// kernel: tpu_custom_call.1
$region0: #{tpu_custom_call.1}
  #allocation0 [shape = 'u32[]', space=smem, size = 0x4, offset = 0x4, fixed_abs, tag = 'smem constant byte address 0x4 - core index']
  #allocation1 [shape = 'u32[144,128]{1,0:T(1,128)}', space=vmem, size = 0x12000, scoped, tag = 'internal scratch']
  %s0 = inlined_call_operand.vmem [shape: f32[8,32], index: 0, kind: input, shape index: {}]
  %s1 = inlined_call_operand.vmem [shape: f32[32,4], index: 1, kind: input, shape index: {}]
  %s2 = inlined_call_operand.vmem [shape: bf16[8,4], index: 2, kind: input, shape index: {}]
  %s3 = inlined_call_operand.hbm [shape: f32[8,128], index: 3, kind: output, shape index: {}]
  %s4 = sld [smem:[#allocation0]]
  $region22: #{tpu_custom_call.1} parent=0
    _
  %s6 = ssub.s32 1, %s4
  %s7 = scalar_select 0, %s6, %s4
  $region1: #{tpu_custom_call.1} parent=0
    #allocation2 [shape = 'u8[4096]{0}', space=vmem, size = 0x1000, scoped, tag = 'output window, operand 0, single buffered']
    #allocation3 [shape = 's32[1]{0}', space=sflag, size = 0x4, scoped, tag = 'scoped memory for tpu_custom_call.1']
    %8 = vsyncpa [#allocation3], 0
    // Predicated region
    $region2: #{tpu_custom_call.1} parent=1 // pred_check
      _
    $region3: #{tpu_custom_call.1} parent=1 // pred_check_branch
      %10 = sbr.rel (0) target = $region5
    $region4: #{tpu_custom_call.1} parent=1 // pred_region
      _
    $region5: #{tpu_custom_call.1} parent=1 // pred_fallthru
      _
    // Predicated region
    $region6: #{tpu_custom_call.1} parent=1 // pred_check
      _
    $region7: #{tpu_custom_call.1} parent=1 // pred_check_branch
      %12 = sbr.rel (0) target = $region9
    $region8: #{tpu_custom_call.1} parent=1 // pred_region
      _
    $region9: #{tpu_custom_call.1} parent=1 // pred_fallthru
      _
    // Predicated region
    $region10: #{tpu_custom_call.1} parent=1 // pred_check
      _
    $region11: #{tpu_custom_call.1} parent=1 // pred_check_branch
      %14 = sbr.rel (0) target = $region13
    $region12: #{tpu_custom_call.1} parent=1 // pred_region
      _
    $region13: #{tpu_custom_call.1} parent=1 // pred_fallthru
      _
    %v15 = vld [vmem:[%s0] sm:$0xff]
    %v16 = vmul.f32 %v15, %v15
    %vm17 = vcmask 261120
    %v18 = vsel %vm17, %v16, 0.0
    %19 = vadd.xlane.f32.xlu0 %v18
    %v20 = vpop.xlane.xlu0 %19
    %v21 = vmax.f32 %v20, 1e-16
    %v22 = vrsqrt.pop %v21
    %v23 = vmul.f32 %v15, %v22
    %v24 = vld [vmem:[%s1] sm:$0xff]
    %v25 = vld [vmem:[%s1 + $0x8] sm:$0xff]
    %v26 = vld [vmem:[%s1 + $0x10] sm:$0xff]
    %v27 = vld [vmem:[%s1 + $0x18] sm:$0xff]
    %v29 = vsel %vm17, %v23, 0
    %31 = vmatprep.subr.mxu0 0.0
    %32 = vmatpush1.msra.mxu0 %v24
    %33 = vmatprep.subr.mxu0 0.0
    %34 = vmatpush1.msra.mxu0 %v25
    %35 = vmatprep.subr.mxu0 0.0
    %36 = vmatpush1.msra.mxu0 %v26
    %37 = vmatprep.subr.mxu0 0.0
    %38 = vmatpush1.msra.mxu0 %v27
    %39 = vmatprep.subr.mxu0 0.0
    %40 = vmatpush1.msra.mxu0 0.0
    %41 = vmatprep.subr.mxu0 0.0
    %42 = vmatpush1.msra.mxu0 0.0
    %43 = vmatprep.subr.mxu0 0.0
    %44 = vmatpush1.msra.mxu0 0.0
    %45 = vmatprep.subr.mxu0 0.0
    %46 = vmatpush1.msra.mxu0 0.0
    %47 = vmatprep.subr.mxu0 0.0
    %48 = vmatpush1.msra.mxu0 0.0
    %49 = vmatprep.subr.mxu0 0.0
    %50 = vmatpush1.msra.mxu0 0.0
    %51 = vmatprep.subr.mxu0 0.0
    %52 = vmatpush1.msra.mxu0 0.0
    %53 = vmatprep.subr.mxu0 0.0
    %54 = vmatpush1.msra.mxu0 0.0
    %55 = vmatprep.subr.mxu0 0.0
    %56 = vmatpush1.msra.mxu0 0.0
    %57 = vmatprep.subr.mxu0 0.0
    %58 = vmatpush1.msra.mxu0 0.0
    %59 = vmatprep.subr.mxu0 0.0
    %60 = vmatpush1.msra.mxu0 0.0
    %61 = vmatprep.subr.mxu0 0.0
    %62 = vmatpush1.msra.mxu0 0.0
    %63 = vmatprep.subr.mxu0 0.0
    %64 = vmatpush1.msra.mxu0 0.0
    %65 = vmatprep.subr.mxu0 0.0
    %66 = vmatpush1.msra.mxu0 0.0
    %67 = vmatprep.subr.mxu0 0.0
    %68 = vmatpush1.msra.mxu0 0.0
    %69 = vmatprep.subr.mxu0 0.0
    %70 = vmatpush1.msra.mxu0 0.0
    %71 = vmatprep.subr.mxu0 0.0
    %72 = vmatpush1.msra.mxu0 0.0
    %73 = vmatprep.subr.mxu0 0.0
    %74 = vmatpush1.msra.mxu0 0.0
    %75 = vmatprep.subr.mxu0 0.0
    %76 = vmatpush1.msra.mxu0 0.0
    %77 = vmatprep.subr.mxu0 0.0
    %78 = vmatpush1.msra.mxu0 0.0
    %79 = vmatprep.subr.mxu0 0.0
    %80 = vmatpush1.msra.mxu0 0.0
    %81 = vmatprep.subr.mxu0 0.0
    %82 = vmatpush1.msra.mxu0 0.0
    %83 = vmatprep.subr.mxu0 0.0
    %84 = vmatpush1.msra.mxu0 0.0
    %85 = vmatprep.subr.mxu0 0.0
    %86 = vmatpush1.msra.mxu0 0.0
    %87 = vmatprep.subr.mxu0 0.0
    %88 = vmatpush1.msra.mxu0 0.0
    %89 = vmatprep.subr.mxu0 0.0
    %90 = vmatpush1.msra.mxu0 0.0
    %91 = vmatprep.subr.mxu0 0.0
    %92 = vmatpush1.msra.mxu0 0.0
    %93 = vmatprep.subr.mxu0 0.0
    %94 = vmatpush1.msra.mxu0 0.0
    %95 = vmatprep.mubr.f32.mxu0 0.0
    %96 = vmatmul.mubr.f32.gmra.mrb[0].mxu0 %v29
    %v97 = vpop.f32.mrb[0].mxu0
    %v98 = vadd.f32 0.0, %v97
    %v99 = vpop.f32.mrb[0].mxu0
    %100 = vdwg.mxu0
    %v101 = vmul.f32 %v98, 1.442695
    %v102 = vpow.pop %v101
    %v103 = vld [vmem:[%s2] sm:$0xf]
    %v104 = vunpack.c.l.bf16 %v103
    %v105 = vmul.f32 %v102, %v104
    %vm106 = vcmask 31744
    %v107 = vsel %vm106, %v105, 0.0
    %108 = vadd.xlane.f32.xlu0 %v107
    %v109 = vpop.xlane.xlu0 %108
    %v110 = vsel %vm106, %v102, 0.0
    %111 = vadd.xlane.f32.xlu0 %v110
    %v112 = vpop.xlane.xlu0 %111
    %v113 = vsub.f32 %v112, %v109
    %v114 = vlog2.pop %v113
    %v115 = vmul.f32 %v114, 0.6931472
    %v116 = vlog2.pop %v109
    %v117 = vmul.f32 %v116, 0.6931472
    %v118 = vsub.f32 %v115, %v117
    %v119 = vrot.slane %v118, 4
    %v120 = vadd.f32 %v118, %v119
    %v121 = vrot.slane %v120, 2
    %v122 = vadd.f32 %v120, %v121
    %v123 = vrot.slane %v122, 1
    %v124 = vadd.f32 %v122, %v123
    %125 = vst [vmem:[#allocation2] sm:$0xff] %v124
    // Predicated region
    $region14: #{tpu_custom_call.1} parent=1 // pred_check
      _
    $region15: #{tpu_custom_call.1} parent=1 // pred_check_branch
      %127 = sbr.rel (0) target = $region17
    $region16: #{tpu_custom_call.1} parent=1 // pred_region
      %s129 = ssub.s32 128, 128
      %130 = vsyncadd [#allocation3], %s129
      %s132 = sshll.u32 [#allocation2], 4
      %s133 = int_to_ptr.vmem [resolvable:$true] %s132
      %135 = dma.vmem_to_hbm [thread:$0]  %s133, 128, %s3, [#allocation3]
    $region17: #{tpu_custom_call.1} parent=1 // pred_fallthru
      _
    // Predicated region
    $region18: #{tpu_custom_call.1} parent=1 // pred_check
      _
    $region19: #{tpu_custom_call.1} parent=1 // pred_check_branch
      %137 = sbr.rel (0) target = $region21
    $region20: #{tpu_custom_call.1} parent=1 // pred_region
      %138 = dma.done [#allocation3], 128
    $region21: #{tpu_custom_call.1} parent=1 // pred_fallthru
      _
    %139 = vsyncpa [#allocation3], 1

</llo_original>
